<compile_context>
chip_gen: v7x
topology: tpu7x:2x2x1
jax: 0.10.0
libtpu: 0.0.40
codegen_flags: <defaults>
</compile_context>

<pallas_src>
import math

import jax
import jax.numpy as jnp
from jax import lax
from jax.experimental import pallas as pl
from jax.experimental.pallas import tpu as pltpu

_LN_EPS = 1e-5  # nn.LayerNorm default


def _dotgat_kernel(x_ref, conn_ref, wqkv_ref, w1_ref, w2_ref, aux_ref, out_ref):
    TB, A, Hin = x_ref.shape
    F = w1_ref.shape[0]
    cdt = wqkv_ref.dtype          # matmul-input dtype (f32 or bf16); accumulation is f32

    # ---- fused Q/K/V projection: one (TB*A, Hin) x (Hin, 3F) MXU matmul ----------
    x2d = x_ref[...].reshape(TB * A, Hin)                       # merge leading dims (free)
    qkv = jnp.dot(x2d, wqkv_ref[...],
                  preferred_element_type=jnp.float32)           # (TB*A, 3F) f32
    q = qkv[:, 0 * F:1 * F].reshape(TB, A, F).astype(cdt)       # 1/sqrt(F) pre-folded into Wq
    k = qkv[:, 1 * F:2 * F].reshape(TB, A, F).astype(cdt)
    v = qkv[:, 2 * F:3 * F].reshape(TB, A, F).astype(cdt)

    # ---- scores = q @ k^T (batched dot_general, contraction on the feature axis,
    #      no explicit transpose) + connectivity, all in f32 ------------------------
    scores = lax.dot_general(q, k,
                             dimension_numbers=(((2,), (2,)), ((0,), (0,))),
                             preferred_element_type=jnp.float32)  # (TB, A, A)
    scores = scores + conn_ref[...].astype(jnp.float32)

    # ---- numerically stable softmax over neighbours (f32, EUP reciprocal) --------
    m = jnp.max(scores, axis=-1, keepdims=True)
    p = jnp.exp(scores - m)
    alpha = p * pl.reciprocal(jnp.sum(p, axis=-1, keepdims=True), approx=True)
    # TODO(synk): F.dropout(alpha, p=dropout, training=self.training) -- identity in eval mode.

    h = lax.dot_general(alpha.astype(cdt), v,
                        dimension_numbers=(((2,), (1,)), ((0,), (0,))),
                        preferred_element_type=jnp.float32)       # (TB, A, F)
    h = h.reshape(TB * A, F)                                      # merge leading dims (free)

    # ---- forward_proj: Swish -> Linear -> Swish -> Linear (elementwise in f32) ---
    aux = aux_ref[...].astype(jnp.float32)                        # (4, F): b1, b2, ln_w, ln_b
    b1, b2, ln_w, ln_b = aux[0:1], aux[1:2], aux[2:3], aux[3:4]

    h = h * jax.nn.sigmoid(h)
    h = jnp.dot(h.astype(cdt), w1_ref[...], preferred_element_type=jnp.float32) + b1
    h = h * jax.nn.sigmoid(h)
    h = jnp.dot(h.astype(cdt), w2_ref[...], preferred_element_type=jnp.float32) + b2

    # ---- LayerNorm over the feature axis (f32 statistics) -------------------------
    mean = jnp.mean(h, axis=-1, keepdims=True)
    var = jnp.mean((h - mean) ** 2, axis=-1, keepdims=True)
    out = (h - mean) * lax.rsqrt(var + _LN_EPS) * ln_w + ln_b      # (TB*A, F)

    out_ref[...] = out.reshape(TB, A, F).astype(out_ref.dtype)     # split leading dim (free)


def _choose_block_b(B, A, Hin, F, itemsize, target_rows=256):
    """Batch elements per grid step: fill the MXU M dimension (TB*A rows ~ 256),
    keep >=2 grid programs when possible (v7x: 2 TensorCores), stay inside a
    conservative VMEM budget for the double-buffered per-step blocks."""
    tb = max(1, min(B, target_rows // max(A, 1)))
    # x + conn blocks are double-buffered by the auto-pipeline, out block too (f32).
    per_b = 2 * (A * A + A * Hin) * itemsize + 2 * A * F * 4
    tb = max(1, min(tb, (24 * 1024 * 1024) // max(per_b, 1)))
    if B >= 2:
        tb = max(1, min(tb, B // 2))
    while B % tb:
        tb -= 1
    return tb


def pack_params(params, out_features, compute_dtype=jnp.float32):
    """One-time (offline) packing: fuse Wq/Wk/Wv into a single (Hin, 3F) matrix with
    1/sqrt(F) folded into the Q slice, and stack b1/b2/ln_w/ln_b into one (4, F)
    buffer.  compute_dtype=bf16 is the v6e/v7x fast path (f32 accumulation kept)."""
    F = out_features
    inv_scale = 1.0 / math.sqrt(F)
    wqkv = jnp.concatenate(
        [params["wq_t"] * inv_scale, params["wk_t"], params["wv_t"]], axis=1)
    aux = jnp.concatenate(
        [params["b1"], params["b2"], params["ln_w"], params["ln_b"]], axis=0)
    return {
        "wqkv": wqkv.astype(compute_dtype),        # (Hin, 3F)
        "w1": params["w1_t"].astype(compute_dtype),  # (F, F)
        "w2": params["w2_t"].astype(compute_dtype),  # (F, F)
        "aux": aux.astype(jnp.float32),            # biases / LN params stay f32
    }


def dotgat_forward(x, connectivity, packed, *, out_features, block_b=None):
    """x: (B, A, Hin) f32, connectivity: (B, A, A) f32. Returns (B, A, F) f32."""
    B, A, Hin = x.shape
    F = out_features
    cdt = packed["wqkv"].dtype
    itemsize = jnp.dtype(cdt).itemsize

    TB = _choose_block_b(B, A, Hin, F, itemsize) if block_b is None else block_b
    assert B % TB == 0, "block_b must divide the batch size"
    grid_b = B // TB

    # Cast activations to the matmul-input dtype (halves HBM traffic in bf16 mode;
    # connectivity is the dominant A^2 input). Elementwise math stays f32 in-kernel.
    x_in = x.astype(cdt)
    conn_in = connectivity.astype(cdt)

    # Raise the scoped VMEM limit only if the per-step working set needs it
    # (relevant for large A, especially on v7x's 64 MiB physical VMEM).
    est_bytes = (2 * TB * (A * A + A * Hin) * itemsize + 2 * TB * A * F * 4
                 + (Hin * 3 * F + 2 * F * F) * itemsize + 4 * F * 4)
    vmem_limit = None
    if est_bytes > 32 * 1024 * 1024:
        vmem_limit = min(int(est_bytes * 5 // 4), 64 * 1024 * 1024)

    out = pl.pallas_call(
        _dotgat_kernel,
        out_shape=jax.ShapeDtypeStruct((B, A, F), x.dtype),
        grid=(grid_b,),
        in_specs=[
            pl.BlockSpec((TB, A, Hin), lambda b: (b, 0, 0)),    # x
            pl.BlockSpec((TB, A, A), lambda b: (b, 0, 0)),      # connectivity
            pl.BlockSpec((Hin, 3 * F), lambda b: (0, 0)),       # fused Wqkv (scale folded)
            pl.BlockSpec((F, F), lambda b: (0, 0)),             # W1
            pl.BlockSpec((F, F), lambda b: (0, 0)),             # W2
            pl.BlockSpec((4, F), lambda b: (0, 0)),             # b1 / b2 / ln_w / ln_b
        ],
        out_specs=pl.BlockSpec((TB, A, F), lambda b: (b, 0, 0)),
        compiler_params=pltpu.CompilerParams(
            dimension_semantics=("parallel",),
            vmem_limit_bytes=vmem_limit),
    )(x_in, conn_in, packed["wqkv"], packed["w1"], packed["w2"], packed["aux"])
    return out


def init_params(key, in_features, out_features):
    """Deterministic synthetic parameter init (PyTorch Linear-like uniform bounds)."""
    F = out_features
    Hin = in_features
    keys = jax.random.split(key, 8)

    def lin_w(k, fan_in, fan_out):
        bound = 1.0 / math.sqrt(fan_in)
        return jax.random.uniform(k, (fan_in, fan_out), jnp.float32, -bound, bound)

    def lin_b(k, fan_in, fan_out):
        bound = 1.0 / math.sqrt(fan_in)
        return jax.random.uniform(k, (1, fan_out), jnp.float32, -bound, bound)

    return {
        "wq_t": lin_w(keys[0], Hin, F),
        "wk_t": lin_w(keys[1], Hin, F),
        "wv_t": lin_w(keys[2], Hin, F),
        "w1_t": lin_w(keys[3], F, F),
        "b1":   lin_b(keys[4], F, F),
        "w2_t": lin_w(keys[5], F, F),
        "b2":   lin_b(keys[6], F, F),
        "ln_w": jnp.ones((1, F), jnp.float32),
        "ln_b": jnp.zeros((1, F), jnp.float32),
    }


def _reference(x, conn, params, out_features):
    """Pure-JAX reference of the PyTorch forward (eval mode)."""
    F = out_features
    scale = math.sqrt(F)
    q = x @ params["wq_t"]
    k = x @ params["wk_t"]
    v = x @ params["wv_t"]
    scores = jnp.einsum("baf,bcf->bac", q, k) / scale + conn
    alpha = jax.nn.softmax(scores, axis=-1)
    h = jnp.einsum("bac,bcf->baf", alpha, v)
    h = h * jax.nn.sigmoid(h)
    h = h @ params["w1_t"] + params["b1"]
    h = h * jax.nn.sigmoid(h)
    h = h @ params["w2_t"] + params["b2"]
    mean = jnp.mean(h, axis=-1, keepdims=True)
    var = jnp.mean((h - mean) ** 2, axis=-1, keepdims=True)
    return (h - mean) * jax.lax.rsqrt(var + _LN_EPS) * params["ln_w"] + params["ln_b"]


if __name__ == "__main__":
    B, A, H_IN, F_OUT = 2, 8, 16, 32
    key = jax.random.PRNGKey(0)
    kx, kc, kp = jax.random.split(key, 3)

    x = jax.random.normal(kx, (B, A, H_IN), jnp.float32)
    connectivity = jax.random.normal(kc, (B, A, A), jnp.float32)
    params = init_params(kp, H_IN, F_OUT)
    ref = _reference(x, connectivity, params, F_OUT)

    # f32 matmul-input path (exact; v5e-friendly: all elementwise math is f32).
    packed_f32 = pack_params(params, F_OUT, compute_dtype=jnp.float32)
    out_f32 = jax.block_until_ready(
        dotgat_forward(x, connectivity, packed_f32, out_features=F_OUT))
    assert out_f32.shape == (B, A, F_OUT)
    # tolerance covers the approximate (EUP) softmax reciprocal
    assert jnp.allclose(out_f32, ref, atol=5e-3, rtol=5e-3), "f32 mismatch vs reference"

    # bf16 matmul-input fast path (v6e/v7x): f32 accumulation / softmax / LayerNorm.
    packed_bf16 = pack_params(params, F_OUT, compute_dtype=jnp.bfloat16)
    out_bf16 = jax.block_until_ready(
        dotgat_forward(x, connectivity, packed_bf16, out_features=F_OUT))
    assert out_bf16.shape == (B, A, F_OUT)
    assert jnp.allclose(out_bf16, ref, atol=1e-1, rtol=1e-1), "bf16 mismatch vs reference"

    print("KERNEL_OK")
</pallas_src>

<mosaic_0001>
module attributes {stable_mosaic.version = 11 : i64} {
  func.func @_dotgat_kernel(%arg0: i32, %arg1: memref<1x8x16xf32, #tpu.memory_space<vmem>>, %arg2: memref<1x8x8xf32, #tpu.memory_space<vmem>>, %arg3: memref<16x96xf32, #tpu.memory_space<vmem>>, %arg4: memref<32x32xf32, #tpu.memory_space<vmem>>, %arg5: memref<32x32xf32, #tpu.memory_space<vmem>>, %arg6: memref<4x32xf32, #tpu.memory_space<vmem>>, %arg7: memref<1x8x32xf32, #tpu.memory_space<vmem>>) attributes {dimension_semantics = [#tpu.dimension_semantics<parallel>], iteration_bounds = array<i64: 2>, scalar_prefetch = 0 : i64, scratch_operands = 0 : i64, tpu.core_type = #tpu.core_type<tc>, window_params = [{transform_indices = @transform_0, window_bounds = array<i64: 1, 8, 16>}, {transform_indices = @transform_1, window_bounds = array<i64: 1, 8, 8>}, {pipeline_mode = #tpu.pipeline_mode<synchronous>, transform_indices = @transform_2, window_bounds = array<i64: 16, 96>}, {pipeline_mode = #tpu.pipeline_mode<synchronous>, transform_indices = @transform_3, window_bounds = array<i64: 32, 32>}, {pipeline_mode = #tpu.pipeline_mode<synchronous>, transform_indices = @transform_4, window_bounds = array<i64: 32, 32>}, {pipeline_mode = #tpu.pipeline_mode<synchronous>, transform_indices = @transform_5, window_bounds = array<i64: 4, 32>}, {transform_indices = @transform_6, window_bounds = array<i64: 1, 8, 32>}]} {
    %c0 = arith.constant 0 : index
    %c0_0 = arith.constant 0 : index
    %c0_1 = arith.constant 0 : index
    %0 = vector.load %arg1[%c0, %c0_0, %c0_1] : memref<1x8x16xf32, #tpu.memory_space<vmem>>, vector<1x8x16xf32>
    %1 = vector.shape_cast %0 : vector<1x8x16xf32> to vector<8x16xf32>
    %c0_2 = arith.constant 0 : index
    %c0_3 = arith.constant 0 : index
    %2 = vector.load %arg3[%c0_2, %c0_3] : memref<16x96xf32, #tpu.memory_space<vmem>>, vector<16x96xf32>
    %cst = arith.constant dense<0.000000e+00> : vector<8x96xf32>
    %3 = tpu.matmul %1, %2, %cst {dimension_numbers = #tpu.dot_dimension_numbers<[1], [0], [0], [1], [0, 0, 1, 1], [], []>} : vector<8x16xf32>, vector<16x96xf32>, vector<8x96xf32> -> vector<8x96xf32>
    %4 = vector.extract_strided_slice %3 {offsets = [0, 0], sizes = [8, 32], strides = [1, 1]} : vector<8x96xf32> to vector<8x32xf32>
    %5 = vector.shape_cast %4 : vector<8x32xf32> to vector<1x8x32xf32>
    %6 = vector.extract_strided_slice %3 {offsets = [0, 32], sizes = [8, 32], strides = [1, 1]} : vector<8x96xf32> to vector<8x32xf32>
    %7 = vector.shape_cast %6 : vector<8x32xf32> to vector<1x8x32xf32>
    %8 = vector.extract_strided_slice %3 {offsets = [0, 64], sizes = [8, 32], strides = [1, 1]} : vector<8x96xf32> to vector<8x32xf32>
    %9 = vector.shape_cast %8 : vector<8x32xf32> to vector<1x8x32xf32>
    %cst_4 = arith.constant dense<0.000000e+00> : vector<1x8x8xf32>
    %10 = tpu.matmul %5, %7, %cst_4 {dimension_numbers = #tpu.dot_dimension_numbers<[2], [2], [1], [1], [0, 0, 0, 1, 1, 1], [0], [0]>} : vector<1x8x32xf32>, vector<1x8x32xf32>, vector<1x8x8xf32> -> vector<1x8x8xf32>
    %c0_5 = arith.constant 0 : index
    %c0_6 = arith.constant 0 : index
    %c0_7 = arith.constant 0 : index
    %11 = vector.load %arg2[%c0_5, %c0_6, %c0_7] : memref<1x8x8xf32, #tpu.memory_space<vmem>>, vector<1x8x8xf32>
    %12 = arith.addf %10, %11 : vector<1x8x8xf32>
    %cst_8 = arith.constant dense<0xFF800000> : vector<1x8xf32>
    %13 = vector.multi_reduction <maximumf>, %12, %cst_8 [2] : vector<1x8x8xf32> to vector<1x8xf32>
    %14 = vector.shape_cast %13 : vector<1x8xf32> to vector<1x8x1xf32>
    %15 = vector.broadcast %14 : vector<1x8x1xf32> to vector<1x8x8xf32>
    %16 = arith.subf %12, %15 : vector<1x8x8xf32>
    %17 = math.exp %16 : vector<1x8x8xf32>
    %cst_9 = arith.constant dense<0.000000e+00> : vector<1x8xf32>
    %18 = vector.multi_reduction <add>, %17, %cst_9 [2] : vector<1x8x8xf32> to vector<1x8xf32>
    %19 = vector.shape_cast %18 : vector<1x8xf32> to vector<1x8x1xf32>
    %20 = tpu.reciprocal %19 {approx = true} : vector<1x8x1xf32> -> vector<1x8x1xf32>
    %21 = vector.broadcast %20 : vector<1x8x1xf32> to vector<1x8x8xf32>
    %22 = arith.mulf %17, %21 : vector<1x8x8xf32>
    %cst_10 = arith.constant dense<0.000000e+00> : vector<1x8x32xf32>
    %23 = tpu.matmul %22, %9, %cst_10 {dimension_numbers = #tpu.dot_dimension_numbers<[2], [1], [1], [2], [0, 0, 0, 1, 1, 2], [0], [0]>} : vector<1x8x8xf32>, vector<1x8x32xf32>, vector<1x8x32xf32> -> vector<1x8x32xf32>
    %24 = vector.shape_cast %23 : vector<1x8x32xf32> to vector<8x32xf32>
    %c0_11 = arith.constant 0 : index
    %c0_12 = arith.constant 0 : index
    %25 = vector.load %arg6[%c0_11, %c0_12] : memref<4x32xf32, #tpu.memory_space<vmem>>, vector<4x32xf32>
    %26 = vector.extract_strided_slice %25 {offsets = [0, 0], sizes = [1, 32], strides = [1, 1]} : vector<4x32xf32> to vector<1x32xf32>
    %27 = vector.extract_strided_slice %25 {offsets = [1, 0], sizes = [1, 32], strides = [1, 1]} : vector<4x32xf32> to vector<1x32xf32>
    %28 = vector.extract_strided_slice %25 {offsets = [2, 0], sizes = [1, 32], strides = [1, 1]} : vector<4x32xf32> to vector<1x32xf32>
    %29 = vector.extract_strided_slice %25 {offsets = [3, 0], sizes = [1, 32], strides = [1, 1]} : vector<4x32xf32> to vector<1x32xf32>
    %30 = arith.negf %24 : vector<8x32xf32>
    %31 = math.exp %30 : vector<8x32xf32>
    %cst_13 = arith.constant 1.000000e+00 : f32
    %32 = vector.broadcast %cst_13 : f32 to vector<8x32xf32>
    %33 = arith.addf %32, %31 : vector<8x32xf32>
    %34 = arith.divf %32, %33 : vector<8x32xf32>
    %35 = arith.mulf %24, %34 : vector<8x32xf32>
    %c0_14 = arith.constant 0 : index
    %c0_15 = arith.constant 0 : index
    %36 = vector.load %arg4[%c0_14, %c0_15] : memref<32x32xf32, #tpu.memory_space<vmem>>, vector<32x32xf32>
    %cst_16 = arith.constant dense<0.000000e+00> : vector<8x32xf32>
    %37 = tpu.matmul %35, %36, %cst_16 {dimension_numbers = #tpu.dot_dimension_numbers<[1], [0], [0], [1], [0, 0, 1, 1], [], []>} : vector<8x32xf32>, vector<32x32xf32>, vector<8x32xf32> -> vector<8x32xf32>
    %38 = vector.broadcast %26 : vector<1x32xf32> to vector<8x32xf32>
    %39 = arith.addf %37, %38 : vector<8x32xf32>
    %40 = arith.negf %39 : vector<8x32xf32>
    %41 = math.exp %40 : vector<8x32xf32>
    %cst_17 = arith.constant 1.000000e+00 : f32
    %42 = vector.broadcast %cst_17 : f32 to vector<8x32xf32>
    %43 = arith.addf %42, %41 : vector<8x32xf32>
    %44 = arith.divf %42, %43 : vector<8x32xf32>
    %45 = arith.mulf %39, %44 : vector<8x32xf32>
    %c0_18 = arith.constant 0 : index
    %c0_19 = arith.constant 0 : index
    %46 = vector.load %arg5[%c0_18, %c0_19] : memref<32x32xf32, #tpu.memory_space<vmem>>, vector<32x32xf32>
    %cst_20 = arith.constant dense<0.000000e+00> : vector<8x32xf32>
    %47 = tpu.matmul %45, %46, %cst_20 {dimension_numbers = #tpu.dot_dimension_numbers<[1], [0], [0], [1], [0, 0, 1, 1], [], []>} : vector<8x32xf32>, vector<32x32xf32>, vector<8x32xf32> -> vector<8x32xf32>
    %48 = vector.broadcast %27 : vector<1x32xf32> to vector<8x32xf32>
    %49 = arith.addf %47, %48 : vector<8x32xf32>
    %cst_21 = arith.constant dense<0.000000e+00> : vector<8xf32>
    %50 = vector.multi_reduction <add>, %49, %cst_21 [1] : vector<8x32xf32> to vector<8xf32>
    %51 = vector.shape_cast %50 : vector<8xf32> to vector<8x1xf32>
    %cst_22 = arith.constant 3.200000e+01 : f32
    %52 = vector.broadcast %cst_22 : f32 to vector<8x1xf32>
    %53 = arith.divf %51, %52 : vector<8x1xf32>
    %54 = vector.broadcast %53 : vector<8x1xf32> to vector<8x32xf32>
    %55 = arith.subf %49, %54 : vector<8x32xf32>
    %56 = arith.mulf %55, %55 : vector<8x32xf32>
    %cst_23 = arith.constant dense<0.000000e+00> : vector<8xf32>
    %57 = vector.multi_reduction <add>, %56, %cst_23 [1] : vector<8x32xf32> to vector<8xf32>
    %58 = vector.shape_cast %57 : vector<8xf32> to vector<8x1xf32>
    %cst_24 = arith.constant 3.200000e+01 : f32
    %59 = vector.broadcast %cst_24 : f32 to vector<8x1xf32>
    %60 = arith.divf %58, %59 : vector<8x1xf32>
    %61 = vector.broadcast %53 : vector<8x1xf32> to vector<8x32xf32>
    %62 = arith.subf %49, %61 : vector<8x32xf32>
    %cst_25 = arith.constant 9.99999974E-6 : f32
    %63 = vector.broadcast %cst_25 : f32 to vector<8x1xf32>
    %64 = arith.addf %60, %63 : vector<8x1xf32>
    %65 = math.rsqrt %64 : vector<8x1xf32>
    %66 = vector.broadcast %65 : vector<8x1xf32> to vector<8x32xf32>
    %67 = arith.mulf %62, %66 : vector<8x32xf32>
    %68 = vector.broadcast %28 : vector<1x32xf32> to vector<8x32xf32>
    %69 = arith.mulf %67, %68 : vector<8x32xf32>
    %70 = vector.broadcast %29 : vector<1x32xf32> to vector<8x32xf32>
    %71 = arith.addf %69, %70 : vector<8x32xf32>
    %72 = vector.shape_cast %71 : vector<8x32xf32> to vector<1x8x32xf32>
    %c0_26 = arith.constant 0 : index
    %c0_27 = arith.constant 0 : index
    %c0_28 = arith.constant 0 : index
    %73 = vector.load %arg7[%c0_26, %c0_27, %c0_28] : memref<1x8x32xf32, #tpu.memory_space<vmem>>, vector<1x8x32xf32>
    tpu.vector_store %arg7[%c0_26, %c0_27, %c0_28], %72 {strides = array<i32>} : memref<1x8x32xf32, #tpu.memory_space<vmem>>, vector<1x8x32xf32>,
    return
  }
  func.func @transform_0(%arg0: i32) -> (i32, i32, i32) {
    %c0_i32 = arith.constant 0 : i32
    %c0_i32_0 = arith.constant 0 : i32
    %c0_i32_1 = arith.constant 0 : i32
    return %arg0, %c0_i32, %c0_i32_0 : i32, i32, i32
  }
  func.func @transform_1(%arg0: i32) -> (i32, i32, i32) {
    %c0_i32 = arith.constant 0 : i32
    %c0_i32_0 = arith.constant 0 : i32
    %c0_i32_1 = arith.constant 0 : i32
    return %arg0, %c0_i32, %c0_i32_0 : i32, i32, i32
  }
  func.func @transform_2(%arg0: i32) -> (i32, i32) {
    %c0_i32 = arith.constant 0 : i32
    %c0_i32_0 = arith.constant 0 : i32
    %c0_i32_1 = arith.constant 0 : i32
    return %c0_i32, %c0_i32_0 : i32, i32
  }
  func.func @transform_3(%arg0: i32) -> (i32, i32) {
    %c0_i32 = arith.constant 0 : i32
    %c0_i32_0 = arith.constant 0 : i32
    %c0_i32_1 = arith.constant 0 : i32
    return %c0_i32, %c0_i32_0 : i32, i32
  }
  func.func @transform_4(%arg0: i32) -> (i32, i32) {
    %c0_i32 = arith.constant 0 : i32
    %c0_i32_0 = arith.constant 0 : i32
    %c0_i32_1 = arith.constant 0 : i32
    return %c0_i32, %c0_i32_0 : i32, i32
  }
  func.func @transform_5(%arg0: i32) -> (i32, i32) {
    %c0_i32 = arith.constant 0 : i32
    %c0_i32_0 = arith.constant 0 : i32
    %c0_i32_1 = arith.constant 0 : i32
    return %c0_i32, %c0_i32_0 : i32, i32
  }
  func.func @transform_6(%arg0: i32) -> (i32, i32, i32) {
    %c0_i32 = arith.constant 0 : i32
    %c0_i32_0 = arith.constant 0 : i32
    %c0_i32_1 = arith.constant 0 : i32
    return %arg0, %c0_i32, %c0_i32_0 : i32, i32, i32
  }
}

</mosaic_0001>

<llo_original>
// kernel: tpu_custom_call.1
$region0: #{tpu_custom_call.1}
  #allocation0 [shape = 'u32[]', space=smem, size = 0x4, offset = 0x4, fixed_abs, tag = 'smem constant byte address 0x4 - core index']
  #allocation1 [shape = 'u32[144,128]{1,0:T(1,128)}', space=vmem, size = 0x12000, scoped, tag = 'internal scratch']
  %s0 = inlined_call_operand.hbm [shape: f32[2,8,16], index: 0, kind: input, shape index: {}]
  %s1 = inlined_call_operand.hbm [shape: f32[2,8,8], index: 1, kind: input, shape index: {}]
  %s2 = inlined_call_operand.hbm [shape: f32[16,96], index: 2, kind: input, shape index: {}]
  %s3 = inlined_call_operand.hbm [shape: f32[32,32], index: 3, kind: input, shape index: {}]
  %s4 = inlined_call_operand.hbm [shape: f32[32,32], index: 4, kind: input, shape index: {}]
  %s5 = inlined_call_operand.vmem [shape: f32[4,32], index: 5, kind: input, shape index: {}]
  %s6 = inlined_call_operand.hbm [shape: f32[2,8,32], index: 6, kind: output, shape index: {}]
  %s7 = sld [smem:[#allocation0]]
  $region77: #{tpu_custom_call.1} parent=0
    _
  %s9 = ssub.s32 1, %s7
  %s10 = scalar_select 0, %s9, %s7
  $region1: #{tpu_custom_call.1} parent=0
    #allocation2 [shape = 'u8[8192]{0}', space=vmem, size = 0x2000, scoped, tag = 'input window, operand 0']
    #allocation3 [shape = 's32[2]{0}', space=sflag, size = 0x8, scoped, tag = 'scoped memory for tpu_custom_call.1']
    #allocation4 [shape = 's32[2]{0}', space=sflag, size = 0x8, scoped, tag = 'scoped memory for tpu_custom_call.1']
    #allocation5 [shape = 'u8[8192]{0}', space=vmem, size = 0x2000, scoped, tag = 'input window, operand 1']
    #allocation6 [shape = 's32[2]{0}', space=sflag, size = 0x8, scoped, tag = 'scoped memory for tpu_custom_call.1']
    #allocation7 [shape = 'u8[8192]{0}', space=vmem, size = 0x2000, scoped, tag = 'input window, operand 2, single buffered']
    #allocation8 [shape = 'u8[16384]{0}', space=vmem, size = 0x4000, scoped, tag = 'input window, operand 3, single buffered']
    #allocation9 [shape = 's32[1]{0}', space=sflag, size = 0x4, scoped, tag = 'scoped memory for tpu_custom_call.1']
    #allocation10 [shape = 'u8[16384]{0}', space=vmem, size = 0x4000, scoped, tag = 'input window, operand 4, single buffered']
    #allocation11 [shape = 'u8[8192]{0}', space=vmem, size = 0x2000, scoped, tag = 'output window, operand 0']
    %11 = vsyncpa [#allocation3], 0
    %s12 = scalar_lea.sflag [#allocation3], 1
    %13 = vsyncpa %s12, 0
    %14 = vsyncpa [#allocation6], 0
    %s15 = scalar_lea.sflag [#allocation6], 1
    %16 = vsyncpa %s15, 0
    %17 = vsyncpa [#allocation9], 0
    %18 = vsyncpa [#allocation4], 0
    %s19 = scalar_lea.sflag [#allocation4], 1
    %20 = vsyncpa %s19, 0
    loop: start=0, step=1, limit=4
    $region2: #{tpu_custom_call.1} parent=1 // loop_pre_header
      _
    $region3: #{tpu_custom_call.1} parent=1 // loop_header
      %s22 = sphi 0, %s26
      %p23 = scmp.ge.s32.totalorder %s22, 4
      %s32 = sphi 0, %s34
      %s35 = sphi 0, %s32
      %s36 = sphi 0, %s35
      %s52 = sphi 0, %s36
      %s58 = sphi 0, %s60
      %s61 = sphi 0, %s58
      %s62 = sphi 0, %s61
      %s78 = sphi 0, %s62
      %s82 = sphi 0, %s82
      %s84 = sphi 0, %s82
      %s85 = sphi 0, %s84
      %s99 = sphi 0, %s85
      %s103 = sphi 0, %s103
      %s105 = sphi 0, %s103
      %s106 = sphi 0, %s105
      %s120 = sphi 0, %s106
      %s124 = sphi 0, %s124
      %s126 = sphi 0, %s124
      %s127 = sphi 0, %s126
      %s141 = sphi 0, %s127
      %s145 = sphi 0, %s145
      %s147 = sphi 0, %s145
      %s148 = sphi 0, %s147
      %s162 = sphi 0, %s148
      %s168 = sphi 0, %s170
      %s171 = sphi 0, %s168
      %s172 = sphi 0, %s171
      %s188 = sphi 0, %s172
    $region4: #{tpu_custom_call.1} parent=1 // loop_header_branch
      %25 = sbr.rel (%p23) target = $region8
    $region5: #{tpu_custom_call.1} parent=1 // loop_body
      %s27 = ssub.s32 %s22, 1
      %s28 = ssub.s32 %s22, 2
      %s29 = sadd.s32 %s22, 1
      %s30 = ssub.s32 %s22, %s29
      %p31 = scmp.eq.s32.totalorder %s30, 0
      %s33 = sadd.s32 %s32, 1
      %s34 = scalar_select %p31, %s32, %s33
      %p37 = pneg %p31
      %p38 = scmp.eq.s32.totalorder %s22, 1
      %p39 = por %p37, %p38
      %p40 = scmp.ne.s32.totalorder %s32, %s35
      %p41 = scmp.eq.s32.totalorder %s22, 0
      %p42 = por %p40, %p41
      %p43 = scmp.ne.s32.totalorder %s32, %s35
      %p44 = scmp.eq.s32.totalorder %s27, 1
      %p45 = por %p43, %p44
      %p46 = scmp.ne.s32.totalorder %s35, %s36
      %p47 = scmp.eq.s32.totalorder %s27, 0
      %p48 = por %p46, %p47
      %p49 = scmp.ne.s32.totalorder %s35, %s36
      %p50 = scmp.eq.s32.totalorder %s28, 1
      %p51 = por %p49, %p50
      %p53 = scmp.ne.s32.totalorder %s36, %s52
      %p54 = scmp.eq.s32.totalorder %s28, 0
      %p55 = por %p53, %p54
      %s56 = ssub.s32 %s22, %s29
      %p57 = scmp.eq.s32.totalorder %s56, 0
      %s59 = sadd.s32 %s58, 1
      %s60 = scalar_select %p57, %s58, %s59
      %p63 = pneg %p57
      %p64 = scmp.eq.s32.totalorder %s22, 1
      %p65 = por %p63, %p64
      %p66 = scmp.ne.s32.totalorder %s58, %s61
      %p67 = scmp.eq.s32.totalorder %s22, 0
      %p68 = por %p66, %p67
      %p69 = scmp.ne.s32.totalorder %s58, %s61
      %p70 = scmp.eq.s32.totalorder %s27, 1
      %p71 = por %p69, %p70
      %p72 = scmp.ne.s32.totalorder %s61, %s62
      %p73 = scmp.eq.s32.totalorder %s27, 0
      %p74 = por %p72, %p73
      %p75 = scmp.ne.s32.totalorder %s61, %s62
      %p76 = scmp.eq.s32.totalorder %s28, 1
      %p77 = por %p75, %p76
      %p79 = scmp.ne.s32.totalorder %s62, %s78
      %p80 = scmp.eq.s32.totalorder %s28, 0
      %p81 = por %p79, %p80
      %s83 = sadd.s32 %s82, 1
      %p86 = scmp.eq.s32.totalorder %s22, 1
      %p87 = scmp.ne.s32.totalorder %s82, %s84
      %p88 = scmp.eq.s32.totalorder %s22, 0
      %p89 = por %p87, %p88
      %p90 = scmp.ne.s32.totalorder %s82, %s84
      %p91 = scmp.eq.s32.totalorder %s27, 1
      %p92 = por %p90, %p91
      %p93 = scmp.ne.s32.totalorder %s84, %s85
      %p94 = scmp.eq.s32.totalorder %s27, 0
      %p95 = por %p93, %p94
      %p96 = scmp.ne.s32.totalorder %s84, %s85
      %p97 = scmp.eq.s32.totalorder %s28, 1
      %p98 = por %p96, %p97
      %p100 = scmp.ne.s32.totalorder %s85, %s99
      %p101 = scmp.eq.s32.totalorder %s28, 0
      %p102 = por %p100, %p101
      %s104 = sadd.s32 %s103, 1
      %p107 = scmp.eq.s32.totalorder %s22, 1
      %p108 = scmp.ne.s32.totalorder %s103, %s105
      %p109 = scmp.eq.s32.totalorder %s22, 0
      %p110 = por %p108, %p109
      %p111 = scmp.ne.s32.totalorder %s103, %s105
      %p112 = scmp.eq.s32.totalorder %s27, 1
      %p113 = por %p111, %p112
      %p114 = scmp.ne.s32.totalorder %s105, %s106
      %p115 = scmp.eq.s32.totalorder %s27, 0
      %p116 = por %p114, %p115
      %p117 = scmp.ne.s32.totalorder %s105, %s106
      %p118 = scmp.eq.s32.totalorder %s28, 1
      %p119 = por %p117, %p118
      %p121 = scmp.ne.s32.totalorder %s106, %s120
      %p122 = scmp.eq.s32.totalorder %s28, 0
      %p123 = por %p121, %p122
      %s125 = sadd.s32 %s124, 1
      %p128 = scmp.eq.s32.totalorder %s22, 1
      %p129 = scmp.ne.s32.totalorder %s124, %s126
      %p130 = scmp.eq.s32.totalorder %s22, 0
      %p131 = por %p129, %p130
      %p132 = scmp.ne.s32.totalorder %s124, %s126
      %p133 = scmp.eq.s32.totalorder %s27, 1
      %p134 = por %p132, %p133
      %p135 = scmp.ne.s32.totalorder %s126, %s127
      %p136 = scmp.eq.s32.totalorder %s27, 0
      %p137 = por %p135, %p136
      %p138 = scmp.ne.s32.totalorder %s126, %s127
      %p139 = scmp.eq.s32.totalorder %s28, 1
      %p140 = por %p138, %p139
      %p142 = scmp.ne.s32.totalorder %s127, %s141
      %p143 = scmp.eq.s32.totalorder %s28, 0
      %p144 = por %p142, %p143
      %s146 = sadd.s32 %s145, 1
      %p149 = scmp.eq.s32.totalorder %s22, 1
      %p150 = scmp.ne.s32.totalorder %s145, %s147
      %p151 = scmp.eq.s32.totalorder %s22, 0
      %p152 = por %p150, %p151
      %p153 = scmp.ne.s32.totalorder %s145, %s147
      %p154 = scmp.eq.s32.totalorder %s27, 1
      %p155 = por %p153, %p154
      %p156 = scmp.ne.s32.totalorder %s147, %s148
      %p157 = scmp.eq.s32.totalorder %s27, 0
      %p158 = por %p156, %p157
      %p159 = scmp.ne.s32.totalorder %s147, %s148
      %p160 = scmp.eq.s32.totalorder %s28, 1
      %p161 = por %p159, %p160
      %p163 = scmp.ne.s32.totalorder %s148, %s162
      %p164 = scmp.eq.s32.totalorder %s28, 0
      %p165 = por %p163, %p164
      %s166 = ssub.s32 %s22, %s29
      %p167 = scmp.eq.s32.totalorder %s166, 0
      %s169 = sadd.s32 %s168, 1
      %s170 = scalar_select %p167, %s168, %s169
      %p173 = pneg %p167
      %p174 = scmp.eq.s32.totalorder %s22, 1
      %p175 = por %p173, %p174
      %p176 = scmp.ne.s32.totalorder %s168, %s171
      %p177 = scmp.eq.s32.totalorder %s22, 0
      %p178 = por %p176, %p177
      %p179 = scmp.ne.s32.totalorder %s168, %s171
      %p180 = scmp.eq.s32.totalorder %s27, 1
      %p181 = por %p179, %p180
      %p182 = scmp.ne.s32.totalorder %s171, %s172
      %p183 = scmp.eq.s32.totalorder %s27, 0
      %p184 = por %p182, %p183
      %p185 = scmp.ne.s32.totalorder %s171, %s172
      %p186 = scmp.eq.s32.totalorder %s28, 1
      %p187 = por %p185, %p186
      %p189 = scmp.ne.s32.totalorder %s172, %s188
      %p190 = scmp.eq.s32.totalorder %s28, 0
      %p191 = por %p189, %p190
      %p192 = scmp.le.s32.totalorder 1, %s22
      %p193 = scmp.lt.s32.totalorder %s22, 3
      %p194 = pnand %p192, %p193
      %p195 = pneg %p194
      // Predicated region
      $region9: #{tpu_custom_call.1} parent=5 // pred_check
        _
      $region10: #{tpu_custom_call.1} parent=5 // pred_check_branch
        %197 = sbr.rel (%p194) target = $region12
      $region11: #{tpu_custom_call.1} parent=5 // pred_region
        %s198 = ssub.s32 %s22, 1
        // Predicated region
        $region13: #{tpu_custom_call.1} parent=11 // pred_check
          %p199 = pneg %p95
        $region14: #{tpu_custom_call.1} parent=11 // pred_check_branch
          %201 = sbr.rel (%p199) target = $region16
        $region15: #{tpu_custom_call.1} parent=11 // pred_region
          %s203 = ssub.s32 256, 256
          %204 = vsyncadd [#allocation6], %s203
          %s205 = sshll.u32 [#allocation7], 4
          %s206 = int_to_ptr.vmem [resolvable:$true] %s205
          %211 = dma.hbm_to_vmem [thread:$0]  %s2, 256, %s206, [#allocation6], 128, 128, 8
        $region16: #{tpu_custom_call.1} parent=11 // pred_fallthru
          _
        // Predicated region
        $region17: #{tpu_custom_call.1} parent=11 // pred_check
          %p212 = pneg %p116
        $region18: #{tpu_custom_call.1} parent=11 // pred_check_branch
          %214 = sbr.rel (%p212) target = $region20
        $region19: #{tpu_custom_call.1} parent=11 // pred_region
          %s216 = ssub.s32 512, 512
          %217 = vsyncadd [#allocation9], %s216
          %s218 = sshll.u32 [#allocation8], 4
          %s219 = int_to_ptr.vmem [resolvable:$true] %s218
          %224 = dma.hbm_to_vmem [thread:$0]  %s3, 512, %s219, [#allocation9], 128, 128, 8
        $region20: #{tpu_custom_call.1} parent=11 // pred_fallthru
          _
        // Predicated region
        $region21: #{tpu_custom_call.1} parent=11 // pred_check
          %p225 = pneg %p137
        $region22: #{tpu_custom_call.1} parent=11 // pred_check_branch
          %227 = sbr.rel (%p225) target = $region24
        $region23: #{tpu_custom_call.1} parent=11 // pred_region
          %s229 = ssub.s32 512, 512
          %230 = vsyncadd [#allocation9], %s229
          %s231 = sshll.u32 [#allocation10], 4
          %s232 = int_to_ptr.vmem [resolvable:$true] %s231
          %237 = dma.hbm_to_vmem [thread:$0]  %s4, 512, %s232, [#allocation9], 128, 128, 8
        $region24: #{tpu_custom_call.1} parent=11 // pred_fallthru
          _
        // Predicated region
        $region25: #{tpu_custom_call.1} parent=11 // pred_check
          %p238 = pneg %p158
        $region26: #{tpu_custom_call.1} parent=11 // pred_check_branch
          %240 = sbr.rel (%p238) target = $region28
        $region27: #{tpu_custom_call.1} parent=11 // pred_region
          _
        $region28: #{tpu_custom_call.1} parent=11 // pred_fallthru
          _
      $region12: #{tpu_custom_call.1} parent=5 // pred_fallthru
        _
      %p241 = scmp.lt.s32.totalorder %s22, 2
      // Predicated region
      $region29: #{tpu_custom_call.1} parent=5 // pred_check
        %p242 = pneg %p241
      $region30: #{tpu_custom_call.1} parent=5 // pred_check_branch
        %244 = sbr.rel (%p242) target = $region32
      $region31: #{tpu_custom_call.1} parent=5 // pred_region
        // Predicated region
        $region33: #{tpu_custom_call.1} parent=31 // pred_check
          %p245 = pneg %p42
        $region34: #{tpu_custom_call.1} parent=31 // pred_check_branch
          %247 = sbr.rel (%p245) target = $region36
        $region35: #{tpu_custom_call.1} parent=31 // pred_region
          %s248 = sand.u32 %s32, 1
          %s249 = scalar_lea.sflag [#allocation3], %s248
          %s250 = sand.u32 %s32, 1
          %s251 = smul.addr %s250, 8
          %s252 = scalar_lea.vmem [#allocation2], %s251
          %s254 = ssub.s32 128, 128
          %255 = vsyncadd %s249, %s254
          %s256 = smul.addr %s22, 128
          %s257 = scalar_lea.hbm %s0, %s256
          %s259 = sshll.u32 %s252, 4
          %s260 = int_to_ptr.vmem [resolvable:$true] %s259
          %262 = dma.hbm_to_vmem [thread:$0]  %s257, 128, %s260, %s249
        $region36: #{tpu_custom_call.1} parent=31 // pred_fallthru
          _
        // Predicated region
        $region37: #{tpu_custom_call.1} parent=31 // pred_check
          %p263 = pneg %p68
        $region38: #{tpu_custom_call.1} parent=31 // pred_check_branch
          %265 = sbr.rel (%p263) target = $region40
        $region39: #{tpu_custom_call.1} parent=31 // pred_region
          %s266 = sand.u32 %s22, 1
          %s267 = scalar_lea.sflag [#allocation6], %s266
          %s268 = sand.u32 %s58, 1
          %s269 = smul.addr %s268, 8
          %s270 = scalar_lea.vmem [#allocation5], %s269
          %s272 = ssub.s32 128, 128
          %273 = vsyncadd %s267, %s272
          %s274 = smul.addr %s22, 128
          %s275 = scalar_lea.hbm %s1, %s274
          %s277 = sshll.u32 %s270, 4
          %s278 = int_to_ptr.vmem [resolvable:$true] %s277
          %280 = dma.hbm_to_vmem [thread:$0]  %s275, 128, %s278, %s267
        $region40: #{tpu_custom_call.1} parent=31 // pred_fallthru
          _
      $region32: #{tpu_custom_call.1} parent=5 // pred_fallthru
        _
      %p281 = scmp.le.s32.totalorder 1, %s22
      %p282 = scmp.lt.s32.totalorder %s22, 3
      %p283 = pnand %p281, %p282
      %p284 = pneg %p283
      // Predicated region
      $region41: #{tpu_custom_call.1} parent=5 // pred_check
        _
      $region42: #{tpu_custom_call.1} parent=5 // pred_check_branch
        %286 = sbr.rel (%p283) target = $region44
      $region43: #{tpu_custom_call.1} parent=5 // pred_region
        %s287 = ssub.s32 %s22, 1
        %s288 = sand.u32 %s35, 1
        %s289 = scalar_lea.sflag [#allocation3], %s288
        %s290 = sand.u32 %s35, 1
        %s291 = smul.addr %s290, 8
        %s292 = scalar_lea.vmem [#allocation2], %s291
        // Predicated region
        $region45: #{tpu_custom_call.1} parent=43 // pred_check
          %p293 = pneg %p48
        $region46: #{tpu_custom_call.1} parent=43 // pred_check_branch
          %295 = sbr.rel (%p293) target = $region48
        $region47: #{tpu_custom_call.1} parent=43 // pred_region
          %296 = dma.done %s289, 128
        $region48: #{tpu_custom_call.1} parent=43 // pred_fallthru
          _
        %s297 = sand.u32 %s27, 1
        %s298 = scalar_lea.sflag [#allocation6], %s297
        %s299 = sand.u32 %s61, 1
        %s300 = smul.addr %s299, 8
        %s301 = scalar_lea.vmem [#allocation5], %s300
        // Predicated region
        $region49: #{tpu_custom_call.1} parent=43 // pred_check
          %p302 = pneg %p74
        $region50: #{tpu_custom_call.1} parent=43 // pred_check_branch
          %304 = sbr.rel (%p302) target = $region52
        $region51: #{tpu_custom_call.1} parent=43 // pred_region
          %305 = dma.done %s298, 128
        $region52: #{tpu_custom_call.1} parent=43 // pred_fallthru
          _
        // Predicated region
        $region53: #{tpu_custom_call.1} parent=43 // pred_check
          %p306 = pneg %p95
        $region54: #{tpu_custom_call.1} parent=43 // pred_check_branch
          %308 = sbr.rel (%p306) target = $region56
        $region55: #{tpu_custom_call.1} parent=43 // pred_region
          %309 = dma.done [#allocation6], 256
        $region56: #{tpu_custom_call.1} parent=43 // pred_fallthru
          _
        // Predicated region
        $region57: #{tpu_custom_call.1} parent=43 // pred_check
          %p310 = pneg %p116
        $region58: #{tpu_custom_call.1} parent=43 // pred_check_branch
          %312 = sbr.rel (%p310) target = $region60
        $region59: #{tpu_custom_call.1} parent=43 // pred_region
          %313 = dma.done [#allocation9], 512
        $region60: #{tpu_custom_call.1} parent=43 // pred_fallthru
          _
        // Predicated region
        $region61: #{tpu_custom_call.1} parent=43 // pred_check
          %p314 = pneg %p137
        $region62: #{tpu_custom_call.1} parent=43 // pred_check_branch
          %316 = sbr.rel (%p314) target = $region64
        $region63: #{tpu_custom_call.1} parent=43 // pred_region
          %317 = dma.done [#allocation9], 512
        $region64: #{tpu_custom_call.1} parent=43 // pred_fallthru
          _
        %s318 = sand.u32 %s35, 1
        %s319 = scalar_lea.sflag [#allocation3], %s318
        %s320 = sand.u32 %s35, 1
        %s321 = smul.addr %s320, 8
        %s322 = scalar_lea.vmem [#allocation2], %s321
        %p323 = pneg %p48
        %p324 = pneg %p45
        %s325 = sand.u32 %s27, 1
        %s326 = scalar_lea.sflag [#allocation6], %s325
        %s327 = sand.u32 %s61, 1
        %s328 = smul.addr %s327, 8
        %s329 = scalar_lea.vmem [#allocation5], %s328
        %p330 = pneg %p74
        %p331 = pneg %p71
        %p332 = pneg %p95
        %p333 = pneg %p92
        %p334 = pneg %p116
        %p335 = pneg %p113
        %p336 = pneg %p137
        %p337 = pneg %p134
        %p338 = pneg %p158
        %p339 = pneg %p155
        %p340 = pneg %p184
        %p341 = pneg %p181
        %s342 = sand.u32 %s171, 1
        %s343 = scalar_lea.sflag [#allocation4], %s342
        %s344 = sand.u32 %s171, 1
        %s345 = smul.addr %s344, 8
        %s346 = scalar_lea.vmem [#allocation11], %s345
        %v347 = vld [vmem:[%s292] sm:$0xff]
        %v348 = vld [vmem:[#allocation7] sm:$0xff]
        %v349 = vld [vmem:[#allocation7 + $0x8] sm:$0xff]
        %vm350 = vcmask 130048
        %v352 = vsel %vm350, %v347, 0
        %354 = vmatprep.subr.mxu0 0.0
        %355 = vmatpush1.msra.mxu0 %v348
        %356 = vmatprep.subr.mxu0 0.0
        %357 = vmatpush1.msra.mxu0 %v349
        %358 = vmatprep.subr.mxu0 0.0
        %359 = vmatpush1.msra.mxu0 0.0
        %360 = vmatprep.subr.mxu0 0.0
        %361 = vmatpush1.msra.mxu0 0.0
        %362 = vmatprep.subr.mxu0 0.0
        %363 = vmatpush1.msra.mxu0 0.0
        %364 = vmatprep.subr.mxu0 0.0
        %365 = vmatpush1.msra.mxu0 0.0
        %366 = vmatprep.subr.mxu0 0.0
        %367 = vmatpush1.msra.mxu0 0.0
        %368 = vmatprep.subr.mxu0 0.0
        %369 = vmatpush1.msra.mxu0 0.0
        %370 = vmatprep.subr.mxu0 0.0
        %371 = vmatpush1.msra.mxu0 0.0
        %372 = vmatprep.subr.mxu0 0.0
        %373 = vmatpush1.msra.mxu0 0.0
        %374 = vmatprep.subr.mxu0 0.0
        %375 = vmatpush1.msra.mxu0 0.0
        %376 = vmatprep.subr.mxu0 0.0
        %377 = vmatpush1.msra.mxu0 0.0
        %378 = vmatprep.subr.mxu0 0.0
        %379 = vmatpush1.msra.mxu0 0.0
        %380 = vmatprep.subr.mxu0 0.0
        %381 = vmatpush1.msra.mxu0 0.0
        %382 = vmatprep.subr.mxu0 0.0
        %383 = vmatpush1.msra.mxu0 0.0
        %384 = vmatprep.subr.mxu0 0.0
        %385 = vmatpush1.msra.mxu0 0.0
        %386 = vmatprep.subr.mxu0 0.0
        %387 = vmatpush1.msra.mxu0 0.0
        %388 = vmatprep.subr.mxu0 0.0
        %389 = vmatpush1.msra.mxu0 0.0
        %390 = vmatprep.subr.mxu0 0.0
        %391 = vmatpush1.msra.mxu0 0.0
        %392 = vmatprep.subr.mxu0 0.0
        %393 = vmatpush1.msra.mxu0 0.0
        %394 = vmatprep.subr.mxu0 0.0
        %395 = vmatpush1.msra.mxu0 0.0
        %396 = vmatprep.subr.mxu0 0.0
        %397 = vmatpush1.msra.mxu0 0.0
        %398 = vmatprep.subr.mxu0 0.0
        %399 = vmatpush1.msra.mxu0 0.0
        %400 = vmatprep.subr.mxu0 0.0
        %401 = vmatpush1.msra.mxu0 0.0
        %402 = vmatprep.subr.mxu0 0.0
        %403 = vmatpush1.msra.mxu0 0.0
        %404 = vmatprep.subr.mxu0 0.0
        %405 = vmatpush1.msra.mxu0 0.0
        %406 = vmatprep.subr.mxu0 0.0
        %407 = vmatpush1.msra.mxu0 0.0
        %408 = vmatprep.subr.mxu0 0.0
        %409 = vmatpush1.msra.mxu0 0.0
        %410 = vmatprep.subr.mxu0 0.0
        %411 = vmatpush1.msra.mxu0 0.0
        %412 = vmatprep.subr.mxu0 0.0
        %413 = vmatpush1.msra.mxu0 0.0
        %414 = vmatprep.subr.mxu0 0.0
        %415 = vmatpush1.msra.mxu0 0.0
        %416 = vmatprep.subr.mxu0 0.0
        %417 = vmatpush1.msra.mxu0 0.0
        %418 = vmatprep.mubr.f32.mxu0 0.0
        %419 = vmatmul.mubr.f32.gmra.mrb[0].mxu0 %v352
        %v420 = vpop.f32.mrb[0].mxu0
        %v421 = vadd.f32 0.0, %v420
        %v422 = vpop.f32.mrb[0].mxu0
        %423 = vdwg.mxu0
        %v424 = vld [vmem:[%s301] sm:$0xff]
        %426 = vrot.lane.b32.xlu0 %v421, 96
        %v427 = vpop.permute.xlu0 %426
        %vm428 = vcmask 261120
        %v429 = vsel %vm428, %v421, 0
        %v431 = vsel %vm428, %v427, 0
        %433 = vmatprep.subr.mxu0 0.0
        %434 = vmatpush1.xpose.msra.mxu0 %v431
        %435 = vmatprep.subr.mxu0 0.0
        %436 = vmatpush1.xpose.msra.mxu0 0.0
        %437 = vmatprep.subr.mxu0 0.0
        %438 = vmatpush1.xpose.msra.mxu0 0.0
        %439 = vmatprep.subr.mxu0 0.0
        %440 = vmatpush1.xpose.msra.mxu0 0.0
        %441 = vmatprep.subr.mxu0 0.0
        %442 = vmatpush1.xpose.msra.mxu0 0.0
        %443 = vmatprep.subr.mxu0 0.0
        %444 = vmatpush1.xpose.msra.mxu0 0.0
        %445 = vmatprep.subr.mxu0 0.0
        %446 = vmatpush1.xpose.msra.mxu0 0.0
        %447 = vmatprep.subr.mxu0 0.0
        %448 = vmatpush1.xpose.msra.mxu0 0.0
        %449 = vmatprep.subr.mxu0 0.0
        %450 = vmatpush1.xpose.msra.mxu0 0.0
        %451 = vmatprep.subr.mxu0 0.0
        %452 = vmatpush1.xpose.msra.mxu0 0.0
        %453 = vmatprep.subr.mxu0 0.0
        %454 = vmatpush1.xpose.msra.mxu0 0.0
        %455 = vmatprep.subr.mxu0 0.0
        %456 = vmatpush1.xpose.msra.mxu0 0.0
        %457 = vmatprep.subr.mxu0 0.0
        %458 = vmatpush1.xpose.msra.mxu0 0.0
        %459 = vmatprep.subr.mxu0 0.0
        %460 = vmatpush1.xpose.msra.mxu0 0.0
        %461 = vmatprep.subr.mxu0 0.0
        %462 = vmatpush1.xpose.msra.mxu0 0.0
        %463 = vmatprep.subr.mxu0 0.0
        %464 = vmatpush1.xpose.msra.mxu0 0.0
        %465 = vmatprep.subr.mxu0 0.0
        %466 = vmatpush1.xpose.msra.mxu0 0.0
        %467 = vmatprep.subr.mxu0 0.0
        %468 = vmatpush1.xpose.msra.mxu0 0.0
        %469 = vmatprep.subr.mxu0 0.0
        %470 = vmatpush1.xpose.msra.mxu0 0.0
        %471 = vmatprep.subr.mxu0 0.0
        %472 = vmatpush1.xpose.msra.mxu0 0.0
        %473 = vmatprep.subr.mxu0 0.0
        %474 = vmatpush1.xpose.msra.mxu0 0.0
        %475 = vmatprep.subr.mxu0 0.0
        %476 = vmatpush1.xpose.msra.mxu0 0.0
        %477 = vmatprep.subr.mxu0 0.0
        %478 = vmatpush1.xpose.msra.mxu0 0.0
        %479 = vmatprep.subr.mxu0 0.0
        %480 = vmatpush1.xpose.msra.mxu0 0.0
        %481 = vmatprep.subr.mxu0 0.0
        %482 = vmatpush1.xpose.msra.mxu0 0.0
        %483 = vmatprep.subr.mxu0 0.0
        %484 = vmatpush1.xpose.msra.mxu0 0.0
        %485 = vmatprep.subr.mxu0 0.0
        %486 = vmatpush1.xpose.msra.mxu0 0.0
        %487 = vmatprep.subr.mxu0 0.0
        %488 = vmatpush1.xpose.msra.mxu0 0.0
        %489 = vmatprep.subr.mxu0 0.0
        %490 = vmatpush1.xpose.msra.mxu0 0.0
        %491 = vmatprep.subr.mxu0 0.0
        %492 = vmatpush1.xpose.msra.mxu0 0.0
        %493 = vmatprep.subr.mxu0 0.0
        %494 = vmatpush1.xpose.msra.mxu0 0.0
        %495 = vmatprep.subr.mxu0 0.0
        %496 = vmatpush1.xpose.msra.mxu0 0.0
        %497 = vmatprep.mubr.f32.mxu0 0.0
        %498 = vmatmul.mubr.f32.gmra.mrb[0].mxu0 %v429
        %v499 = vpop.f32.mrb[0].mxu0
        %v500 = vadd.f32 %v424, %v499
        %v501 = vpop.f32.mrb[0].mxu0
        %502 = vdwg.mxu0
        %vm503 = vcmask 64512
        %v504 = vsel %vm503, %v500, -inf
        %505 = vmax.xlane.f32.xlu0 %v504
        %v506 = vpop.xlane.xlu0 %505
        %v507 = vsub.f32 %v500, %v506
        %v508 = vmul.f32 %v507, 1.442695
        %v509 = vpow.pop %v508
        %v510 = vsel %vm503, %v509, 0.0
        %511 = vadd.xlane.f32.xlu0 %v510
        %v512 = vpop.xlane.xlu0 %511
        %v513 = vrcp.pop %v512
        %v514 = vmul.f32 %v509, %v513
        %515 = vrot.lane.b32.xlu0 %v421, 64
        %v516 = vpop.permute.xlu0 %515
        %v519 = vsel %vm503, %v514, 0
        %521 = vmatprep.subr.mxu0 0.0
        %522 = vmatpush1.msra.mxu0 %v516
        %523 = vmatprep.subr.mxu0 0.0
        %524 = vmatpush1.msra.mxu0 0.0
        %525 = vmatprep.subr.mxu0 0.0
        %526 = vmatpush1.msra.mxu0 0.0
        %527 = vmatprep.subr.mxu0 0.0
        %528 = vmatpush1.msra.mxu0 0.0
        %529 = vmatprep.subr.mxu0 0.0
        %530 = vmatpush1.msra.mxu0 0.0
        %531 = vmatprep.subr.mxu0 0.0
        %532 = vmatpush1.msra.mxu0 0.0
        %533 = vmatprep.subr.mxu0 0.0
        %534 = vmatpush1.msra.mxu0 0.0
        %535 = vmatprep.subr.mxu0 0.0
        %536 = vmatpush1.msra.mxu0 0.0
        %537 = vmatprep.subr.mxu0 0.0
        %538 = vmatpush1.msra.mxu0 0.0
        %539 = vmatprep.subr.mxu0 0.0
        %540 = vmatpush1.msra.mxu0 0.0
        %541 = vmatprep.subr.mxu0 0.0
        %542 = vmatpush1.msra.mxu0 0.0
        %543 = vmatprep.subr.mxu0 0.0
        %544 = vmatpush1.msra.mxu0 0.0
        %545 = vmatprep.subr.mxu0 0.0
        %546 = vmatpush1.msra.mxu0 0.0
        %547 = vmatprep.subr.mxu0 0.0
        %548 = vmatpush1.msra.mxu0 0.0
        %549 = vmatprep.subr.mxu0 0.0
        %550 = vmatpush1.msra.mxu0 0.0
        %551 = vmatprep.subr.mxu0 0.0
        %552 = vmatpush1.msra.mxu0 0.0
        %553 = vmatprep.subr.mxu0 0.0
        %554 = vmatpush1.msra.mxu0 0.0
        %555 = vmatprep.subr.mxu0 0.0
        %556 = vmatpush1.msra.mxu0 0.0
        %557 = vmatprep.subr.mxu0 0.0
        %558 = vmatpush1.msra.mxu0 0.0
        %559 = vmatprep.subr.mxu0 0.0
        %560 = vmatpush1.msra.mxu0 0.0
        %561 = vmatprep.subr.mxu0 0.0
        %562 = vmatpush1.msra.mxu0 0.0
        %563 = vmatprep.subr.mxu0 0.0
        %564 = vmatpush1.msra.mxu0 0.0
        %565 = vmatprep.subr.mxu0 0.0
        %566 = vmatpush1.msra.mxu0 0.0
        %567 = vmatprep.subr.mxu0 0.0
        %568 = vmatpush1.msra.mxu0 0.0
        %569 = vmatprep.subr.mxu0 0.0
        %570 = vmatpush1.msra.mxu0 0.0
        %571 = vmatprep.subr.mxu0 0.0
        %572 = vmatpush1.msra.mxu0 0.0
        %573 = vmatprep.subr.mxu0 0.0
        %574 = vmatpush1.msra.mxu0 0.0
        %575 = vmatprep.subr.mxu0 0.0
        %576 = vmatpush1.msra.mxu0 0.0
        %577 = vmatprep.subr.mxu0 0.0
        %578 = vmatpush1.msra.mxu0 0.0
        %579 = vmatprep.subr.mxu0 0.0
        %580 = vmatpush1.msra.mxu0 0.0
        %581 = vmatprep.subr.mxu0 0.0
        %582 = vmatpush1.msra.mxu0 0.0
        %583 = vmatprep.subr.mxu0 0.0
        %584 = vmatpush1.msra.mxu0 0.0
        %585 = vmatprep.mubr.f32.mxu0 0.0
        %586 = vmatmul.mubr.f32.gmra.mrb[0].mxu0 %v519
        %v587 = vpop.f32.mrb[0].mxu0
        %v588 = vadd.f32 0.0, %v587
        %v589 = vpop.f32.mrb[0].mxu0
        %590 = vdwg.mxu0
        %v591 = vld [vmem:[%s5] sm:$0xf]
        %v592 = vxor.u32 %v588, 2147483648
        %v593 = vmul.f32 %v592, 1.442695
        %v594 = vpow.pop %v593
        %v595 = vadd.f32 %v594, 1.0
        %v596 = vrcp.pop %v595
        %v597 = vmul.f32 1.0, %v596
        %v598 = vmul.f32 %v588, %v597
        %v599 = vld [vmem:[#allocation8] sm:$0xff]
        %v600 = vld [vmem:[#allocation8 + $0x8] sm:$0xff]
        %v601 = vld [vmem:[#allocation8 + $0x10] sm:$0xff]
        %v602 = vld [vmem:[#allocation8 + $0x18] sm:$0xff]
        %v603 = vlaneseq
        %v604 = vshrl.u32 %v603, 7
        %v605 = vsub.s32 0, %v604
        %v606 = vrot.slane %v591, %v605
        %v608 = vsel %vm428, %v598, 0
        %610 = vmatprep.subr.mxu0 0.0
        %611 = vmatpush1.msra.mxu0 %v599
        %612 = vmatprep.subr.mxu0 0.0
        %613 = vmatpush1.msra.mxu0 %v600
        %614 = vmatprep.subr.mxu0 0.0
        %615 = vmatpush1.msra.mxu0 %v601
        %616 = vmatprep.subr.mxu0 0.0
        %617 = vmatpush1.msra.mxu0 %v602
        %618 = vmatprep.subr.mxu0 0.0
        %619 = vmatpush1.msra.mxu0 0.0
        %620 = vmatprep.subr.mxu0 0.0
        %621 = vmatpush1.msra.mxu0 0.0
        %622 = vmatprep.subr.mxu0 0.0
        %623 = vmatpush1.msra.mxu0 0.0
        %624 = vmatprep.subr.mxu0 0.0
        %625 = vmatpush1.msra.mxu0 0.0
        %626 = vmatprep.subr.mxu0 0.0
        %627 = vmatpush1.msra.mxu0 0.0
        %628 = vmatprep.subr.mxu0 0.0
        %629 = vmatpush1.msra.mxu0 0.0
        %630 = vmatprep.subr.mxu0 0.0
        %631 = vmatpush1.msra.mxu0 0.0
        %632 = vmatprep.subr.mxu0 0.0
        %633 = vmatpush1.msra.mxu0 0.0
        %634 = vmatprep.subr.mxu0 0.0
        %635 = vmatpush1.msra.mxu0 0.0
        %636 = vmatprep.subr.mxu0 0.0
        %637 = vmatpush1.msra.mxu0 0.0
        %638 = vmatprep.subr.mxu0 0.0
        %639 = vmatpush1.msra.mxu0 0.0
        %640 = vmatprep.subr.mxu0 0.0
        %641 = vmatpush1.msra.mxu0 0.0
        %642 = vmatprep.subr.mxu0 0.0
        %643 = vmatpush1.msra.mxu0 0.0
        %644 = vmatprep.subr.mxu0 0.0
        %645 = vmatpush1.msra.mxu0 0.0
        %646 = vmatprep.subr.mxu0 0.0
        %647 = vmatpush1.msra.mxu0 0.0
        %648 = vmatprep.subr.mxu0 0.0
        %649 = vmatpush1.msra.mxu0 0.0
        %650 = vmatprep.subr.mxu0 0.0
        %651 = vmatpush1.msra.mxu0 0.0
        %652 = vmatprep.subr.mxu0 0.0
        %653 = vmatpush1.msra.mxu0 0.0
        %654 = vmatprep.subr.mxu0 0.0
        %655 = vmatpush1.msra.mxu0 0.0
        %656 = vmatprep.subr.mxu0 0.0
        %657 = vmatpush1.msra.mxu0 0.0
        %658 = vmatprep.subr.mxu0 0.0
        %659 = vmatpush1.msra.mxu0 0.0
        %660 = vmatprep.subr.mxu0 0.0
        %661 = vmatpush1.msra.mxu0 0.0
        %662 = vmatprep.subr.mxu0 0.0
        %663 = vmatpush1.msra.mxu0 0.0
        %664 = vmatprep.subr.mxu0 0.0
        %665 = vmatpush1.msra.mxu0 0.0
        %666 = vmatprep.subr.mxu0 0.0
        %667 = vmatpush1.msra.mxu0 0.0
        %668 = vmatprep.subr.mxu0 0.0
        %669 = vmatpush1.msra.mxu0 0.0
        %670 = vmatprep.subr.mxu0 0.0
        %671 = vmatpush1.msra.mxu0 0.0
        %672 = vmatprep.subr.mxu0 0.0
        %673 = vmatpush1.msra.mxu0 0.0
        %674 = vmatprep.mubr.f32.mxu0 0.0
        %675 = vmatmul.mubr.f32.gmra.mrb[0].mxu0 %v608
        %v676 = vpop.f32.mrb[0].mxu0
        %v677 = vadd.f32 %v606, %v676
        %v678 = vpop.f32.mrb[0].mxu0
        %679 = vdwg.mxu0
        %v680 = vxor.u32 %v677, 2147483648
        %v681 = vmul.f32 %v680, 1.442695
        %v682 = vpow.pop %v681
        %v683 = vadd.f32 %v682, 1.0
        %v684 = vrcp.pop %v683
        %v685 = vmul.f32 1.0, %v684
        %v686 = vmul.f32 %v677, %v685
        %v687 = vld [vmem:[#allocation10] sm:$0xff]
        %v688 = vld [vmem:[#allocation10 + $0x8] sm:$0xff]
        %v689 = vld [vmem:[#allocation10 + $0x10] sm:$0xff]
        %v690 = vld [vmem:[#allocation10 + $0x18] sm:$0xff]
        %v691 = vlaneseq
        %v692 = vshrl.u32 %v691, 7
        %v693 = vsub.s32 1, %v692
        %v694 = vrot.slane %v591, %v693
        %v696 = vsel %vm428, %v686, 0
        %698 = vmatprep.subr.mxu0 0.0
        %699 = vmatpush1.msra.mxu0 %v687
        %700 = vmatprep.subr.mxu0 0.0
        %701 = vmatpush1.msra.mxu0 %v688
        %702 = vmatprep.subr.mxu0 0.0
        %703 = vmatpush1.msra.mxu0 %v689
        %704 = vmatprep.subr.mxu0 0.0
        %705 = vmatpush1.msra.mxu0 %v690
        %706 = vmatprep.subr.mxu0 0.0
        %707 = vmatpush1.msra.mxu0 0.0
        %708 = vmatprep.subr.mxu0 0.0
        %709 = vmatpush1.msra.mxu0 0.0
        %710 = vmatprep.subr.mxu0 0.0
        %711 = vmatpush1.msra.mxu0 0.0
        %712 = vmatprep.subr.mxu0 0.0
        %713 = vmatpush1.msra.mxu0 0.0
        %714 = vmatprep.subr.mxu0 0.0
        %715 = vmatpush1.msra.mxu0 0.0
        %716 = vmatprep.subr.mxu0 0.0
        %717 = vmatpush1.msra.mxu0 0.0
        %718 = vmatprep.subr.mxu0 0.0
        %719 = vmatpush1.msra.mxu0 0.0
        %720 = vmatprep.subr.mxu0 0.0
        %721 = vmatpush1.msra.mxu0 0.0
        %722 = vmatprep.subr.mxu0 0.0
        %723 = vmatpush1.msra.mxu0 0.0
        %724 = vmatprep.subr.mxu0 0.0
        %725 = vmatpush1.msra.mxu0 0.0
        %726 = vmatprep.subr.mxu0 0.0
        %727 = vmatpush1.msra.mxu0 0.0
        %728 = vmatprep.subr.mxu0 0.0
        %729 = vmatpush1.msra.mxu0 0.0
        %730 = vmatprep.subr.mxu0 0.0
        %731 = vmatpush1.msra.mxu0 0.0
        %732 = vmatprep.subr.mxu0 0.0
        %733 = vmatpush1.msra.mxu0 0.0
        %734 = vmatprep.subr.mxu0 0.0
        %735 = vmatpush1.msra.mxu0 0.0
        %736 = vmatprep.subr.mxu0 0.0
        %737 = vmatpush1.msra.mxu0 0.0
        %738 = vmatprep.subr.mxu0 0.0
        %739 = vmatpush1.msra.mxu0 0.0
        %740 = vmatprep.subr.mxu0 0.0
        %741 = vmatpush1.msra.mxu0 0.0
        %742 = vmatprep.subr.mxu0 0.0
        %743 = vmatpush1.msra.mxu0 0.0
        %744 = vmatprep.subr.mxu0 0.0
        %745 = vmatpush1.msra.mxu0 0.0
        %746 = vmatprep.subr.mxu0 0.0
        %747 = vmatpush1.msra.mxu0 0.0
        %748 = vmatprep.subr.mxu0 0.0
        %749 = vmatpush1.msra.mxu0 0.0
        %750 = vmatprep.subr.mxu0 0.0
        %751 = vmatpush1.msra.mxu0 0.0
        %752 = vmatprep.subr.mxu0 0.0
        %753 = vmatpush1.msra.mxu0 0.0
        %754 = vmatprep.subr.mxu0 0.0
        %755 = vmatpush1.msra.mxu0 0.0
        %756 = vmatprep.subr.mxu0 0.0
        %757 = vmatpush1.msra.mxu0 0.0
        %758 = vmatprep.subr.mxu0 0.0
        %759 = vmatpush1.msra.mxu0 0.0
        %760 = vmatprep.subr.mxu0 0.0
        %761 = vmatpush1.msra.mxu0 0.0
        %762 = vmatprep.mubr.f32.mxu0 0.0
        %763 = vmatmul.mubr.f32.gmra.mrb[0].mxu0 %v696
        %v764 = vpop.f32.mrb[0].mxu0
        %v765 = vadd.f32 %v694, %v764
        %v766 = vpop.f32.mrb[0].mxu0
        %767 = vdwg.mxu0
        %v768 = vsel %vm428, %v765, 0.0
        %769 = vadd.xlane.f32.xlu0 %v768
        %v770 = vpop.xlane.xlu0 %769
        %v771 = vrcp.pop 32.0
        %v772 = vmul.f32 %v770, %v771
        %v773 = vsub.f32 %v765, %v772
        %v774 = vmul.f32 %v773, %v773
        %v775 = vsel %vm428, %v774, 0.0
        %776 = vadd.xlane.f32.xlu0 %v775
        %v777 = vpop.xlane.xlu0 %776
        %v778 = vmul.f32 %v777, %v771
        %v779 = vadd.f32 %v778, 1e-05
        %v780 = vrsqrt.pop %v779
        %v781 = vmul.f32 %v773, %v780
        %v782 = vlaneseq
        %v783 = vshrl.u32 %v782, 7
        %v784 = vsub.s32 2, %v783
        %v785 = vrot.slane %v591, %v784
        %v786 = vmul.f32 %v781, %v785
        %v787 = vlaneseq
        %v788 = vshrl.u32 %v787, 7
        %v789 = vsub.s32 3, %v788
        %v790 = vrot.slane %v591, %v789
        %v791 = vadd.f32 %v786, %v790
        %792 = vst.msk [vmem:[%s346] sm:$0xff] %vm428, %v791
        %s793 = sand.u32 %s171, 1
        %s794 = scalar_lea.sflag [#allocation4], %s793
        %s795 = sand.u32 %s171, 1
        %s796 = smul.addr %s795, 8
        %s797 = scalar_lea.vmem [#allocation11], %s796
        // Predicated region
        $region65: #{tpu_custom_call.1} parent=43 // pred_check
          %p798 = pneg %p181
        $region66: #{tpu_custom_call.1} parent=43 // pred_check_branch
          %800 = sbr.rel (%p798) target = $region68
        $region67: #{tpu_custom_call.1} parent=43 // pred_region
          %s802 = ssub.s32 128, 128
          %803 = vsyncadd %s794, %s802
          %s804 = smul.addr %s27, 128
          %s805 = scalar_lea.hbm %s6, %s804
          %s807 = sshll.u32 %s797, 4
          %s808 = int_to_ptr.vmem [resolvable:$true] %s807
          %810 = dma.vmem_to_hbm [thread:$0]  %s808, 128, %s805, %s794
        $region68: #{tpu_custom_call.1} parent=43 // pred_fallthru
          _
      $region44: #{tpu_custom_call.1} parent=5 // pred_fallthru
        _
      %p811 = scmp.le.s32.totalorder 2, %s22
      // Predicated region
      $region69: #{tpu_custom_call.1} parent=5 // pred_check
        %p812 = pneg %p811
      $region70: #{tpu_custom_call.1} parent=5 // pred_check_branch
        %814 = sbr.rel (%p812) target = $region72
      $region71: #{tpu_custom_call.1} parent=5 // pred_region
        %s815 = ssub.s32 %s22, 2
        // Predicated region
        $region73: #{tpu_custom_call.1} parent=71 // pred_check
          %p816 = pneg %p187
        $region74: #{tpu_custom_call.1} parent=71 // pred_check_branch
          %818 = sbr.rel (%p816) target = $region76
        $region75: #{tpu_custom_call.1} parent=71 // pred_region
          %s819 = sand.u32 %s172, 1
          %s820 = scalar_lea.sflag [#allocation4], %s819
          %s821 = sand.u32 %s172, 1
          %s822 = smul.addr %s821, 8
          %s823 = scalar_lea.vmem [#allocation11], %s822
          %824 = dma.done %s820, 128
        $region76: #{tpu_custom_call.1} parent=71 // pred_fallthru
          _
      $region72: #{tpu_custom_call.1} parent=5 // pred_fallthru
        _
    $region6: #{tpu_custom_call.1} parent=1 // loop_footer
      %s26 = sadd.s32 1, %s22
    $region7: #{tpu_custom_call.1} parent=1 // loop_footer_branch
      %21 = sbr.rel target = $region3
    $region8: #{tpu_custom_call.1} parent=1 // loop_exit
      _
    %825 = vsyncpa [#allocation3], 1
    %s826 = scalar_lea.sflag [#allocation3], 1
    %827 = vsyncpa %s826, 1
    %828 = vsyncpa [#allocation6], 1
    %s829 = scalar_lea.sflag [#allocation6], 1
    %830 = vsyncpa %s829, 1
    %831 = vsyncpa [#allocation9], 1
    %832 = vsyncpa [#allocation4], 1
    %s833 = scalar_lea.sflag [#allocation4], 1
    %834 = vsyncpa %s833, 1

</llo_original>
